<compile_context>
chip_gen: v5e
topology: v5e:2x2
jax: 0.10.0
libtpu: 0.0.40
codegen_flags: <defaults>
</compile_context>

<pallas_src>
import jax
import jax.numpy as jnp
from jax.experimental import pallas as pl
from jax.experimental.pallas import tpu as pltpu


def _round_up(x, m):
    return (x + m - 1) // m * m


def _vmem_config():
    """Return (tile budget bytes, explicit vmem_limit_bytes), gen-gated.

    v7x has 64 MiB VMEM per TensorCore -> keep the conservative 24/32 MiB pair.
    v5e/v6e have 128 MiB -> use a bigger budget so TM can grow (fewer grid
    steps, less per-step overhead). The explicit limit is load-bearing on v5e
    (16 MiB scoped default).
    """
    phys = 64 * 1024 * 1024  # conservative default (v7x per-TC)
    try:
        phys = int(pltpu.get_tpu_info().vmem_capacity_bytes)
    except Exception:
        pass
    if phys <= 64 * 1024 * 1024:
        return 24 * 1024 * 1024, 32 * 1024 * 1024
    return 48 * 1024 * 1024, min(96 * 1024 * 1024, phys - 32 * 1024 * 1024)


def _choose_tile_m(batch, d, out_features, budget_bytes):
    """Largest batch tile TM (multiple of 8, <= 4096) whose working set fits:
    2 x-buffers (f32 rows) + 2 out-buffers (lane-padded f32 rows) + resident
    weight/bias (counted twice to be safe against double-buffering)."""
    fixed = 2 * (d * out_features * 4 + 8 * 128 * 4)  # weight + padded bias tile
    avail = max(budget_bytes - fixed, 1 << 20)
    per_row = 2 * (d * 4 + 128 * 4)  # f32 x row + lane-padded f32 out row, x2 bufs
    tm = int(min(4096, avail // per_row))
    tm = (tm // 8) * 8
    tm = min(tm, _round_up(batch, 8))
    return max(8, tm)


def _linear_kernel(x_ref, w_ref, b_ref, o_ref):
    # x_ref: [TM, D] f32, w_ref: [D, OUT] f32, b_ref: [1, OUT] f32,
    # o_ref: [TM, OUT] f32.  Single full-K MXU matmul, f32 accumulation,
    # bias folded into the store (no wrapper epilogue).
    o_ref[...] = (
        jnp.dot(x_ref[...], w_ref[...], preferred_element_type=jnp.float32)
        + b_ref[...]
    )


def logistic_regression_forward(x, weight, bias):
    """Forward pass of nn.Linear(input_size, 2).

    x:      [B, D] float32
    weight: [out_features, D] float32  (torch nn.Linear layout)
    bias:   [out_features]    float32
    returns [B, out_features] float32
    """
    B, D = x.shape
    out_features = weight.shape[0]

    # Narrow resident weight [D, out_features]; bias as a [1, out_features] row.
    w_t = weight.T.astype(jnp.float32)
    b2d = bias.reshape(1, out_features).astype(jnp.float32)

    budget, vmem_limit = _vmem_config()
    tm = _choose_tile_m(B, D, out_features, budget)
    grid = (pl.cdiv(B, tm),)  # no jnp.pad: Pallas masks the ragged last block

    cost = pl.CostEstimate(
        flops=2 * B * D * out_features,
        transcendentals=0,
        bytes_accessed=4 * (B * D + D * out_features + out_features + B * out_features),
    )

    out = pl.pallas_call(
        _linear_kernel,
        out_shape=jax.ShapeDtypeStruct((B, out_features), jnp.float32),
        grid_spec=pltpu.PrefetchScalarGridSpec(
            num_scalar_prefetch=0,
            grid=grid,
            in_specs=[
                pl.BlockSpec((tm, D), lambda i: (i, 0)),                # x batch tile
                pl.BlockSpec((D, out_features), lambda i: (0, 0)),      # resident W^T
                pl.BlockSpec((1, out_features), lambda i: (0, 0)),      # resident bias
            ],
            out_specs=pl.BlockSpec((tm, out_features), lambda i: (i, 0)),
        ),
        compiler_params=pltpu.CompilerParams(
            dimension_semantics=("parallel",),  # independent batch tiles
            vmem_limit_bytes=vmem_limit,
        ),
        cost_estimate=cost,
    )(x, w_t, b2d)

    return out


if __name__ == "__main__":
    # Deterministic parameter / input construction.
    # input_size stands in for len(TEXT.vocab); small but MXU/lane friendly.
    batch = 8
    input_size = 1024
    out_features = 2

    key = jax.random.PRNGKey(0)
    kx, kw, kb = jax.random.split(key, 3)

    # nn.Linear default init: U(-1/sqrt(in), 1/sqrt(in))
    bound = 1.0 / jnp.sqrt(jnp.float32(input_size))
    weight = jax.random.uniform(
        kw, (out_features, input_size), jnp.float32, -bound, bound
    )  # torch layout [out, in]
    bias = jax.random.uniform(kb, (out_features,), jnp.float32, -bound, bound)

    x = jax.random.normal(kx, (batch, input_size), jnp.float32)

    out = logistic_regression_forward(x, weight, bias)
    out = jax.block_until_ready(out)

    assert out.shape == (batch, out_features)

    # Reference: full-f32 math (kernel now also consumes f32 inputs).
    ref_f32 = x @ weight.T + bias
    assert jnp.allclose(out, ref_f32, atol=2e-2, rtol=2e-2), (
        jnp.max(jnp.abs(out - ref_f32))
    )

    print("KERNEL_OK")
</pallas_src>

<mosaic_0001>
module attributes {stable_mosaic.version = 11 : i64} {
  func.func @_linear_kernel(%arg0: i32, %arg1: memref<8x1024xf32, #tpu.memory_space<vmem>>, %arg2: memref<1024x2xf32, #tpu.memory_space<vmem>>, %arg3: memref<1x2xf32, #tpu.memory_space<vmem>>, %arg4: memref<8x2xf32, #tpu.memory_space<vmem>>) attributes {dimension_semantics = [#tpu.dimension_semantics<parallel>], iteration_bounds = array<i64: 1>, scalar_prefetch = 0 : i64, scratch_operands = 0 : i64, tpu.core_type = #tpu.core_type<tc>, window_params = [{transform_indices = @transform_0, window_bounds = array<i64: 8, 1024>}, {pipeline_mode = #tpu.pipeline_mode<synchronous>, transform_indices = @transform_1, window_bounds = array<i64: 1024, 2>}, {pipeline_mode = #tpu.pipeline_mode<synchronous>, transform_indices = @transform_2, window_bounds = array<i64: 1, 2>}, {transform_indices = @transform_3, window_bounds = array<i64: 8, 2>}]} {
    %c0 = arith.constant 0 : index
    %c0_0 = arith.constant 0 : index
    %0 = vector.load %arg1[%c0, %c0_0] : memref<8x1024xf32, #tpu.memory_space<vmem>>, vector<8x1024xf32>
    %c0_1 = arith.constant 0 : index
    %c0_2 = arith.constant 0 : index
    %1 = vector.load %arg2[%c0_1, %c0_2] : memref<1024x2xf32, #tpu.memory_space<vmem>>, vector<1024x2xf32>
    %cst = arith.constant dense<0.000000e+00> : vector<8x2xf32>
    %2 = tpu.matmul %0, %1, %cst {dimension_numbers = #tpu.dot_dimension_numbers<[1], [0], [0], [1], [0, 0, 1, 1], [], []>} : vector<8x1024xf32>, vector<1024x2xf32>, vector<8x2xf32> -> vector<8x2xf32>
    %c0_3 = arith.constant 0 : index
    %c0_4 = arith.constant 0 : index
    %3 = vector.load %arg3[%c0_3, %c0_4] : memref<1x2xf32, #tpu.memory_space<vmem>>, vector<1x2xf32>
    %4 = vector.broadcast %3 : vector<1x2xf32> to vector<8x2xf32>
    %5 = arith.addf %2, %4 : vector<8x2xf32>
    %c0_5 = arith.constant 0 : index
    %c0_6 = arith.constant 0 : index
    %6 = vector.load %arg4[%c0_5, %c0_6] : memref<8x2xf32, #tpu.memory_space<vmem>>, vector<8x2xf32>
    tpu.vector_store %arg4[%c0_5, %c0_6], %5 {strides = array<i32>} : memref<8x2xf32, #tpu.memory_space<vmem>>, vector<8x2xf32>,
    return
  }
  func.func @transform_0(%arg0: i32) -> (i32, i32) {
    %c0_i32 = arith.constant 0 : i32
    %c0_i32_0 = arith.constant 0 : i32
    return %arg0, %c0_i32 : i32, i32
  }
  func.func @transform_1(%arg0: i32) -> (i32, i32) {
    %c0_i32 = arith.constant 0 : i32
    %c0_i32_0 = arith.constant 0 : i32
    %c0_i32_1 = arith.constant 0 : i32
    return %c0_i32, %c0_i32_0 : i32, i32
  }
  func.func @transform_2(%arg0: i32) -> (i32, i32) {
    %c0_i32 = arith.constant 0 : i32
    %c0_i32_0 = arith.constant 0 : i32
    %c0_i32_1 = arith.constant 0 : i32
    return %c0_i32, %c0_i32_0 : i32, i32
  }
  func.func @transform_3(%arg0: i32) -> (i32, i32) {
    %c0_i32 = arith.constant 0 : i32
    %c0_i32_0 = arith.constant 0 : i32
    return %arg0, %c0_i32 : i32, i32
  }
}

</mosaic_0001>

<llo_original>
// kernel: tpu_custom_call.1
$region0: #{tpu_custom_call.1}
  #allocation0 [shape = 'u32[]', space=smem, size = 0x4, offset = 0x4, fixed_abs, tag = 'smem constant byte address 0x4 - core index']
  #allocation1 [shape = 'u32[72,128]{1,0:T(1,128)}', space=vmem, size = 0x9000, scoped, tag = 'internal scratch']
  %s0 = inlined_call_operand.vmem [shape: f32[8,1024], index: 0, kind: input, shape index: {}]
  %s1 = inlined_call_operand.vmem [shape: f32[1024,2], index: 1, kind: input, shape index: {}]
  %s2 = inlined_call_operand.vmem [shape: f32[1,2], index: 2, kind: input, shape index: {}]
  %s3 = inlined_call_operand.vmem [shape: f32[8,2], index: 3, kind: output, shape index: {}]
  %s4 = sld [smem:[#allocation0]]
  $region22: #{tpu_custom_call.1} parent=0
    _
  %s6 = ssub.s32 1, %s4
  %s7 = scalar_select 0, %s6, %s4
  // Predicated region
  $region2: #{tpu_custom_call.1} parent=0 // pred_check
    _
  $region3: #{tpu_custom_call.1} parent=0 // pred_check_branch
    %9 = sbr.rel (0) target = $region5
  $region4: #{tpu_custom_call.1} parent=0 // pred_region
    _
  $region5: #{tpu_custom_call.1} parent=0 // pred_fallthru
    _
  // Predicated region
  $region6: #{tpu_custom_call.1} parent=0 // pred_check
    _
  $region7: #{tpu_custom_call.1} parent=0 // pred_check_branch
    %11 = sbr.rel (0) target = $region9
  $region8: #{tpu_custom_call.1} parent=0 // pred_region
    _
  $region9: #{tpu_custom_call.1} parent=0 // pred_fallthru
    _
  // Predicated region
  $region10: #{tpu_custom_call.1} parent=0 // pred_check
    _
  $region11: #{tpu_custom_call.1} parent=0 // pred_check_branch
    %13 = sbr.rel (0) target = $region13
  $region12: #{tpu_custom_call.1} parent=0 // pred_region
    _
  $region13: #{tpu_custom_call.1} parent=0 // pred_fallthru
    _
  %v14 = vld [vmem:[%s0] sm:$0xff]
  %v15 = vld [vmem:[%s0 + $0x8] sm:$0xff]
  %v16 = vld [vmem:[%s0 + $0x10] sm:$0xff]
  %v17 = vld [vmem:[%s0 + $0x18] sm:$0xff]
  %v18 = vld [vmem:[%s0 + $0x20] sm:$0xff]
  %v19 = vld [vmem:[%s0 + $0x28] sm:$0xff]
  %v20 = vld [vmem:[%s0 + $0x30] sm:$0xff]
  %v21 = vld [vmem:[%s0 + $0x38] sm:$0xff]
  %v22 = vld [vmem:[%s1] sm:$0xff]
  %v23 = vld [vmem:[%s1 + $0x8] sm:$0xff]
  %v24 = vld [vmem:[%s1 + $0x10] sm:$0xff]
  %v25 = vld [vmem:[%s1 + $0x18] sm:$0xff]
  %v26 = vld [vmem:[%s1 + $0x20] sm:$0xff]
  %v27 = vld [vmem:[%s1 + $0x28] sm:$0xff]
  %v28 = vld [vmem:[%s1 + $0x30] sm:$0xff]
  %v29 = vld [vmem:[%s1 + $0x38] sm:$0xff]
  %v30 = vld [vmem:[%s1 + $0x40] sm:$0xff]
  %v31 = vld [vmem:[%s1 + $0x48] sm:$0xff]
  %v32 = vld [vmem:[%s1 + $0x50] sm:$0xff]
  %v33 = vld [vmem:[%s1 + $0x58] sm:$0xff]
  %v34 = vld [vmem:[%s1 + $0x60] sm:$0xff]
  %v35 = vld [vmem:[%s1 + $0x68] sm:$0xff]
  %v36 = vld [vmem:[%s1 + $0x70] sm:$0xff]
  %v37 = vld [vmem:[%s1 + $0x78] sm:$0xff]
  %v38 = vld [vmem:[%s1 + $0x80] sm:$0xff]
  %v39 = vld [vmem:[%s1 + $0x88] sm:$0xff]
  %v40 = vld [vmem:[%s1 + $0x90] sm:$0xff]
  %v41 = vld [vmem:[%s1 + $0x98] sm:$0xff]
  %v42 = vld [vmem:[%s1 + $0xa0] sm:$0xff]
  %v43 = vld [vmem:[%s1 + $0xa8] sm:$0xff]
  %v44 = vld [vmem:[%s1 + $0xb0] sm:$0xff]
  %v45 = vld [vmem:[%s1 + $0xb8] sm:$0xff]
  %v46 = vld [vmem:[%s1 + $0xc0] sm:$0xff]
  %v47 = vld [vmem:[%s1 + $0xc8] sm:$0xff]
  %v48 = vld [vmem:[%s1 + $0xd0] sm:$0xff]
  %v49 = vld [vmem:[%s1 + $0xd8] sm:$0xff]
  %v50 = vld [vmem:[%s1 + $0xe0] sm:$0xff]
  %v51 = vld [vmem:[%s1 + $0xe8] sm:$0xff]
  %v52 = vld [vmem:[%s1 + $0xf0] sm:$0xff]
  %v53 = vld [vmem:[%s1 + $0xf8] sm:$0xff]
  %v54 = vld [vmem:[%s1 + $0x100] sm:$0xff]
  %v55 = vld [vmem:[%s1 + $0x108] sm:$0xff]
  %v56 = vld [vmem:[%s1 + $0x110] sm:$0xff]
  %v57 = vld [vmem:[%s1 + $0x118] sm:$0xff]
  %v58 = vld [vmem:[%s1 + $0x120] sm:$0xff]
  %v59 = vld [vmem:[%s1 + $0x128] sm:$0xff]
  %v60 = vld [vmem:[%s1 + $0x130] sm:$0xff]
  %v61 = vld [vmem:[%s1 + $0x138] sm:$0xff]
  %v62 = vld [vmem:[%s1 + $0x140] sm:$0xff]
  %v63 = vld [vmem:[%s1 + $0x148] sm:$0xff]
  %v64 = vld [vmem:[%s1 + $0x150] sm:$0xff]
  %v65 = vld [vmem:[%s1 + $0x158] sm:$0xff]
  %v66 = vld [vmem:[%s1 + $0x160] sm:$0xff]
  %v67 = vld [vmem:[%s1 + $0x168] sm:$0xff]
  %v68 = vld [vmem:[%s1 + $0x170] sm:$0xff]
  %v69 = vld [vmem:[%s1 + $0x178] sm:$0xff]
  %v70 = vld [vmem:[%s1 + $0x180] sm:$0xff]
  %v71 = vld [vmem:[%s1 + $0x188] sm:$0xff]
  %v72 = vld [vmem:[%s1 + $0x190] sm:$0xff]
  %v73 = vld [vmem:[%s1 + $0x198] sm:$0xff]
  %v74 = vld [vmem:[%s1 + $0x1a0] sm:$0xff]
  %v75 = vld [vmem:[%s1 + $0x1a8] sm:$0xff]
  %v76 = vld [vmem:[%s1 + $0x1b0] sm:$0xff]
  %v77 = vld [vmem:[%s1 + $0x1b8] sm:$0xff]
  %v78 = vld [vmem:[%s1 + $0x1c0] sm:$0xff]
  %v79 = vld [vmem:[%s1 + $0x1c8] sm:$0xff]
  %v80 = vld [vmem:[%s1 + $0x1d0] sm:$0xff]
  %v81 = vld [vmem:[%s1 + $0x1d8] sm:$0xff]
  %v82 = vld [vmem:[%s1 + $0x1e0] sm:$0xff]
  %v83 = vld [vmem:[%s1 + $0x1e8] sm:$0xff]
  %v84 = vld [vmem:[%s1 + $0x1f0] sm:$0xff]
  %v85 = vld [vmem:[%s1 + $0x1f8] sm:$0xff]
  %v86 = vld [vmem:[%s1 + $0x200] sm:$0xff]
  %v87 = vld [vmem:[%s1 + $0x208] sm:$0xff]
  %v88 = vld [vmem:[%s1 + $0x210] sm:$0xff]
  %v89 = vld [vmem:[%s1 + $0x218] sm:$0xff]
  %v90 = vld [vmem:[%s1 + $0x220] sm:$0xff]
  %v91 = vld [vmem:[%s1 + $0x228] sm:$0xff]
  %v92 = vld [vmem:[%s1 + $0x230] sm:$0xff]
  %v93 = vld [vmem:[%s1 + $0x238] sm:$0xff]
  %v94 = vld [vmem:[%s1 + $0x240] sm:$0xff]
  %v95 = vld [vmem:[%s1 + $0x248] sm:$0xff]
  %v96 = vld [vmem:[%s1 + $0x250] sm:$0xff]
  %v97 = vld [vmem:[%s1 + $0x258] sm:$0xff]
  %v98 = vld [vmem:[%s1 + $0x260] sm:$0xff]
  %v99 = vld [vmem:[%s1 + $0x268] sm:$0xff]
  %v100 = vld [vmem:[%s1 + $0x270] sm:$0xff]
  %v101 = vld [vmem:[%s1 + $0x278] sm:$0xff]
  %v102 = vld [vmem:[%s1 + $0x280] sm:$0xff]
  %v103 = vld [vmem:[%s1 + $0x288] sm:$0xff]
  %v104 = vld [vmem:[%s1 + $0x290] sm:$0xff]
  %v105 = vld [vmem:[%s1 + $0x298] sm:$0xff]
  %v106 = vld [vmem:[%s1 + $0x2a0] sm:$0xff]
  %v107 = vld [vmem:[%s1 + $0x2a8] sm:$0xff]
  %v108 = vld [vmem:[%s1 + $0x2b0] sm:$0xff]
  %v109 = vld [vmem:[%s1 + $0x2b8] sm:$0xff]
  %v110 = vld [vmem:[%s1 + $0x2c0] sm:$0xff]
  %v111 = vld [vmem:[%s1 + $0x2c8] sm:$0xff]
  %v112 = vld [vmem:[%s1 + $0x2d0] sm:$0xff]
  %v113 = vld [vmem:[%s1 + $0x2d8] sm:$0xff]
  %v114 = vld [vmem:[%s1 + $0x2e0] sm:$0xff]
  %v115 = vld [vmem:[%s1 + $0x2e8] sm:$0xff]
  %v116 = vld [vmem:[%s1 + $0x2f0] sm:$0xff]
  %v117 = vld [vmem:[%s1 + $0x2f8] sm:$0xff]
  %v118 = vld [vmem:[%s1 + $0x300] sm:$0xff]
  %v119 = vld [vmem:[%s1 + $0x308] sm:$0xff]
  %v120 = vld [vmem:[%s1 + $0x310] sm:$0xff]
  %v121 = vld [vmem:[%s1 + $0x318] sm:$0xff]
  %v122 = vld [vmem:[%s1 + $0x320] sm:$0xff]
  %v123 = vld [vmem:[%s1 + $0x328] sm:$0xff]
  %v124 = vld [vmem:[%s1 + $0x330] sm:$0xff]
  %v125 = vld [vmem:[%s1 + $0x338] sm:$0xff]
  %v126 = vld [vmem:[%s1 + $0x340] sm:$0xff]
  %v127 = vld [vmem:[%s1 + $0x348] sm:$0xff]
  %v128 = vld [vmem:[%s1 + $0x350] sm:$0xff]
  %v129 = vld [vmem:[%s1 + $0x358] sm:$0xff]
  %v130 = vld [vmem:[%s1 + $0x360] sm:$0xff]
  %v131 = vld [vmem:[%s1 + $0x368] sm:$0xff]
  %v132 = vld [vmem:[%s1 + $0x370] sm:$0xff]
  %v133 = vld [vmem:[%s1 + $0x378] sm:$0xff]
  %v134 = vld [vmem:[%s1 + $0x380] sm:$0xff]
  %v135 = vld [vmem:[%s1 + $0x388] sm:$0xff]
  %v136 = vld [vmem:[%s1 + $0x390] sm:$0xff]
  %v137 = vld [vmem:[%s1 + $0x398] sm:$0xff]
  %v138 = vld [vmem:[%s1 + $0x3a0] sm:$0xff]
  %v139 = vld [vmem:[%s1 + $0x3a8] sm:$0xff]
  %v140 = vld [vmem:[%s1 + $0x3b0] sm:$0xff]
  %v141 = vld [vmem:[%s1 + $0x3b8] sm:$0xff]
  %v142 = vld [vmem:[%s1 + $0x3c0] sm:$0xff]
  %v143 = vld [vmem:[%s1 + $0x3c8] sm:$0xff]
  %v144 = vld [vmem:[%s1 + $0x3d0] sm:$0xff]
  %v145 = vld [vmem:[%s1 + $0x3d8] sm:$0xff]
  %v146 = vld [vmem:[%s1 + $0x3e0] sm:$0xff]
  %v147 = vld [vmem:[%s1 + $0x3e8] sm:$0xff]
  %v148 = vld [vmem:[%s1 + $0x3f0] sm:$0xff]
  %v149 = vld [vmem:[%s1 + $0x3f8] sm:$0xff]
  %v150 = vld [vmem:[%s2] sm:$0x1]
  %v152 = vperm.slane %v150, 0
  %154 = vmatpush.msra.mxu0 %v37
  %155 = vmatpush.msra.mxu0 %v36
  %156 = vmatpush.msra.mxu0 %v35
  %157 = vmatpush.msra.mxu0 %v34
  %158 = vmatpush.msra.mxu0 %v33
  %159 = vmatpush.msra.mxu0 %v32
  %160 = vmatpush.msra.mxu0 %v31
  %161 = vmatpush.msra.mxu0 %v30
  %162 = vmatpush.msra.mxu0 %v29
  %163 = vmatpush.msra.mxu0 %v28
  %164 = vmatpush.msra.mxu0 %v27
  %165 = vmatpush.msra.mxu0 %v26
  %166 = vmatpush.msra.mxu0 %v25
  %167 = vmatpush.msra.mxu0 %v24
  %168 = vmatpush.msra.mxu0 %v23
  %169 = vmatpush.msra.mxu0 %v22
  %170 = vmatmul.f32.gmra.mxu0 %v14
  %v171 = vpop.f32.mrf.mxu0
  %v172 = vadd.f32 %v152, %v171
  %173 = vdwg.mxu0
  %174 = vmatpush.msra.mxu0 %v53
  %175 = vmatpush.msra.mxu0 %v52
  %176 = vmatpush.msra.mxu0 %v51
  %177 = vmatpush.msra.mxu0 %v50
  %178 = vmatpush.msra.mxu0 %v49
  %179 = vmatpush.msra.mxu0 %v48
  %180 = vmatpush.msra.mxu0 %v47
  %181 = vmatpush.msra.mxu0 %v46
  %182 = vmatpush.msra.mxu0 %v45
  %183 = vmatpush.msra.mxu0 %v44
  %184 = vmatpush.msra.mxu0 %v43
  %185 = vmatpush.msra.mxu0 %v42
  %186 = vmatpush.msra.mxu0 %v41
  %187 = vmatpush.msra.mxu0 %v40
  %188 = vmatpush.msra.mxu0 %v39
  %189 = vmatpush.msra.mxu0 %v38
  %190 = vmatmul.f32.gmra.mxu0 %v15
  %v191 = vpop.f32.mrf.mxu0
  %v192 = vadd.f32 %v172, %v191
  %193 = vdwg.mxu0
  %194 = vmatpush.msra.mxu0 %v69
  %195 = vmatpush.msra.mxu0 %v68
  %196 = vmatpush.msra.mxu0 %v67
  %197 = vmatpush.msra.mxu0 %v66
  %198 = vmatpush.msra.mxu0 %v65
  %199 = vmatpush.msra.mxu0 %v64
  %200 = vmatpush.msra.mxu0 %v63
  %201 = vmatpush.msra.mxu0 %v62
  %202 = vmatpush.msra.mxu0 %v61
  %203 = vmatpush.msra.mxu0 %v60
  %204 = vmatpush.msra.mxu0 %v59
  %205 = vmatpush.msra.mxu0 %v58
  %206 = vmatpush.msra.mxu0 %v57
  %207 = vmatpush.msra.mxu0 %v56
  %208 = vmatpush.msra.mxu0 %v55
  %209 = vmatpush.msra.mxu0 %v54
  %210 = vmatmul.f32.gmra.mxu0 %v16
  %v211 = vpop.f32.mrf.mxu0
  %v212 = vadd.f32 %v192, %v211
  %213 = vdwg.mxu0
  %214 = vmatpush.msra.mxu0 %v85
  %215 = vmatpush.msra.mxu0 %v84
  %216 = vmatpush.msra.mxu0 %v83
  %217 = vmatpush.msra.mxu0 %v82
  %218 = vmatpush.msra.mxu0 %v81
  %219 = vmatpush.msra.mxu0 %v80
  %220 = vmatpush.msra.mxu0 %v79
  %221 = vmatpush.msra.mxu0 %v78
  %222 = vmatpush.msra.mxu0 %v77
  %223 = vmatpush.msra.mxu0 %v76
  %224 = vmatpush.msra.mxu0 %v75
  %225 = vmatpush.msra.mxu0 %v74
  %226 = vmatpush.msra.mxu0 %v73
  %227 = vmatpush.msra.mxu0 %v72
  %228 = vmatpush.msra.mxu0 %v71
  %229 = vmatpush.msra.mxu0 %v70
  %230 = vmatmul.f32.gmra.mxu0 %v17
  %v231 = vpop.f32.mrf.mxu0
  %v232 = vadd.f32 %v212, %v231
  %233 = vdwg.mxu0
  %234 = vmatpush.msra.mxu0 %v101
  %235 = vmatpush.msra.mxu0 %v100
  %236 = vmatpush.msra.mxu0 %v99
  %237 = vmatpush.msra.mxu0 %v98
  %238 = vmatpush.msra.mxu0 %v97
  %239 = vmatpush.msra.mxu0 %v96
  %240 = vmatpush.msra.mxu0 %v95
  %241 = vmatpush.msra.mxu0 %v94
  %242 = vmatpush.msra.mxu0 %v93
  %243 = vmatpush.msra.mxu0 %v92
  %244 = vmatpush.msra.mxu0 %v91
  %245 = vmatpush.msra.mxu0 %v90
  %246 = vmatpush.msra.mxu0 %v89
  %247 = vmatpush.msra.mxu0 %v88
  %248 = vmatpush.msra.mxu0 %v87
  %249 = vmatpush.msra.mxu0 %v86
  %250 = vmatmul.f32.gmra.mxu0 %v18
  %v251 = vpop.f32.mrf.mxu0
  %v252 = vadd.f32 %v232, %v251
  %253 = vdwg.mxu0
  %254 = vmatpush.msra.mxu0 %v117
  %255 = vmatpush.msra.mxu0 %v116
  %256 = vmatpush.msra.mxu0 %v115
  %257 = vmatpush.msra.mxu0 %v114
  %258 = vmatpush.msra.mxu0 %v113
  %259 = vmatpush.msra.mxu0 %v112
  %260 = vmatpush.msra.mxu0 %v111
  %261 = vmatpush.msra.mxu0 %v110
  %262 = vmatpush.msra.mxu0 %v109
  %263 = vmatpush.msra.mxu0 %v108
  %264 = vmatpush.msra.mxu0 %v107
  %265 = vmatpush.msra.mxu0 %v106
  %266 = vmatpush.msra.mxu0 %v105
  %267 = vmatpush.msra.mxu0 %v104
  %268 = vmatpush.msra.mxu0 %v103
  %269 = vmatpush.msra.mxu0 %v102
  %270 = vmatmul.f32.gmra.mxu0 %v19
  %v271 = vpop.f32.mrf.mxu0
  %v272 = vadd.f32 %v252, %v271
  %273 = vdwg.mxu0
  %274 = vmatpush.msra.mxu0 %v133
  %275 = vmatpush.msra.mxu0 %v132
  %276 = vmatpush.msra.mxu0 %v131
  %277 = vmatpush.msra.mxu0 %v130
  %278 = vmatpush.msra.mxu0 %v129
  %279 = vmatpush.msra.mxu0 %v128
  %280 = vmatpush.msra.mxu0 %v127
  %281 = vmatpush.msra.mxu0 %v126
  %282 = vmatpush.msra.mxu0 %v125
  %283 = vmatpush.msra.mxu0 %v124
  %284 = vmatpush.msra.mxu0 %v123
  %285 = vmatpush.msra.mxu0 %v122
  %286 = vmatpush.msra.mxu0 %v121
  %287 = vmatpush.msra.mxu0 %v120
  %288 = vmatpush.msra.mxu0 %v119
  %289 = vmatpush.msra.mxu0 %v118
  %290 = vmatmul.f32.gmra.mxu0 %v20
  %v291 = vpop.f32.mrf.mxu0
  %v292 = vadd.f32 %v272, %v291
  %293 = vdwg.mxu0
  %294 = vmatpush.msra.mxu0 %v149
  %295 = vmatpush.msra.mxu0 %v148
  %296 = vmatpush.msra.mxu0 %v147
  %297 = vmatpush.msra.mxu0 %v146
  %298 = vmatpush.msra.mxu0 %v145
  %299 = vmatpush.msra.mxu0 %v144
  %300 = vmatpush.msra.mxu0 %v143
  %301 = vmatpush.msra.mxu0 %v142
  %302 = vmatpush.msra.mxu0 %v141
  %303 = vmatpush.msra.mxu0 %v140
  %304 = vmatpush.msra.mxu0 %v139
  %305 = vmatpush.msra.mxu0 %v138
  %306 = vmatpush.msra.mxu0 %v137
  %307 = vmatpush.msra.mxu0 %v136
  %308 = vmatpush.msra.mxu0 %v135
  %309 = vmatpush.msra.mxu0 %v134
  %310 = vmatmul.f32.gmra.mxu0 %v21
  %v311 = vpop.f32.mrf.mxu0
  %v312 = vadd.f32 %v292, %v311
  %313 = vdwg.mxu0
  %vm314 = vcmask 15360
  %315 = vst.msk [vmem:[%s3] sm:$0xff] %vm314, %v312
  // Predicated region
  $region14: #{tpu_custom_call.1} parent=0 // pred_check
    _
  $region15: #{tpu_custom_call.1} parent=0 // pred_check_branch
    %317 = sbr.rel (0) target = $region17
  $region16: #{tpu_custom_call.1} parent=0 // pred_region
    _
  $region17: #{tpu_custom_call.1} parent=0 // pred_fallthru
    _
  // Predicated region
  $region18: #{tpu_custom_call.1} parent=0 // pred_check
    _
  $region19: #{tpu_custom_call.1} parent=0 // pred_check_branch
    %319 = sbr.rel (0) target = $region21
  $region20: #{tpu_custom_call.1} parent=0 // pred_region
    _
  $region21: #{tpu_custom_call.1} parent=0 // pred_fallthru
    _

</llo_original>
